<compile_context>
chip_gen: v5e
topology: v5e:2x2
jax: 0.10.0
libtpu: 0.0.40
codegen_flags: <defaults>
</compile_context>

<pallas_src>
import functools

import jax
import jax.numpy as jnp
from jax import lax
from jax.experimental import pallas as pl
from jax.experimental.pallas import tpu as pltpu


_NEG_BIG = -1e30


def _round_up(x, m):
    return (x + m - 1) // m * m


def _default_vmem_limit():
    # ~3/4 of physical VMEM: ~96 MiB on v5e/v6e (128 MiB), ~48 MiB on v7x (64 MiB).
    try:
        cap = int(pltpu.get_tpu_info().vmem_capacity_bytes)
    except Exception:
        cap = 128 * 1024 * 1024
    return min((cap * 3) // 4, 110 * 1024 * 1024)


_VMEM_LIMIT = _default_vmem_limit()


def _pick_tile_n(b, wp, br_max, vmem_limit):
    """Object-tile width: multiple of 128 (prefer 256/512 for the 256-wide MXU),
    sized so the f32 sim tile (B*Wpad, tile_n) stays within ~1/4 of scoped VMEM."""
    budget = vmem_limit // 4
    cap = max(128, _round_up(br_max, 128))
    for cand in (512, 256, 128):
        if cand <= cap and b * wp * cand * 4 <= budget:
            return cand
    return 128


def _make_kernel(b, wp, tile_n, nt1, r1, r2, margin, max_violation):
    br1 = b * r1
    br2 = b * r2

    def kernel(cap_ref, wm_ref, inv_ref, obj_t_ref, loss_ref, scores_ref):
        n = pl.program_id(0)
        n_last = pl.num_programs(0) - 1

        @pl.when(n == 0)
        def _():
            scores_ref[...] = jnp.zeros_like(scores_ref)

        # ---- one fused MXU sim matmul per object tile: (B*Wpad, D) @ (D, TILE_N) ----
        sim = jnp.dot(cap_ref[...], obj_t_ref[...],
                      preferred_element_type=jnp.float32)      # (B*Wpad, TILE_N) f32
        sim = sim.reshape(b, wp, tile_n)                        # tile-aligned sublane split
        sim = sim + wm_ref[...][:, :, None]                     # lane-dense word mask
        m = jnp.max(sim, axis=1)                                # (B, TILE_N) max over words

        # ---- in-kernel segment tile (TILE_N, B): object column -> image membership,
        #      pre-scaled by 1/(counts+1e-6) (and predicate_score_rate). Built from iota
        #      multiplies/compares only; padded columns are zeroed by the `< br` guard. ----
        col_i = lax.broadcasted_iota(jnp.int32, (tile_n, b), 0)
        img_i = lax.broadcasted_iota(jnp.int32, (tile_n, b), 1)
        is_p2 = n >= nt1
        col_off = jnp.where(is_p2, (n - nt1) * tile_n, n * tile_n)
        col = col_off + col_i
        r = jnp.where(is_p2, r2, r1)
        br = jnp.where(is_p2, br2, br1)
        lo = img_i * r
        belongs = (col >= lo) & (col < lo + r) & (col < br)
        seg = jnp.where(belongs, inv_ref[...], 0.0)             # (TILE_N, B) f32

        # accumulate scores^T (caption, image); per-image object sum == seg matmul
        scores_ref[...] += jnp.dot(m, seg, preferred_element_type=jnp.float32)

        # ---- hinge-loss epilogue, once, after the last object tile ----
        @pl.when(n == n_last)
        def _():
            st = scores_ref[...]                                # scores^T; loss is
            eye = (lax.broadcasted_iota(jnp.int32, (b, b), 0) ==  # transpose-invariant
                   lax.broadcasted_iota(jnp.int32, (b, b), 1))    # (cost_s <-> cost_im)
            diag = jnp.where(eye, st, 0.0)
            d_col = jnp.sum(diag, axis=1, keepdims=True)        # (B, 1)
            d_row = jnp.sum(diag, axis=0, keepdims=True)        # (1, B)
            cost_a = jnp.where(eye, 0.0, jnp.maximum(margin + st - d_col, 0.0))
            cost_b = jnp.where(eye, 0.0, jnp.maximum(margin + st - d_row, 0.0))
            if max_violation:
                ca = jnp.max(cost_a, axis=1, keepdims=True)     # (B, 1)
                cb = jnp.max(cost_b, axis=0, keepdims=True)     # (1, B)
                loss = (jnp.sum(ca, axis=0, keepdims=True) / float(b) +
                        jnp.sum(cb, axis=1, keepdims=True) / float(b))
            else:
                loss = jnp.sum(jnp.sum(cost_a + cost_b, axis=1, keepdims=True),
                               axis=0, keepdims=True) / float(b * b)
            loss_ref[...] = loss

    return kernel


def _captions_flat(s, lens, wp):
    """(B, W, D) captions -> (B*Wpad, D) bf16 rows + lane-dense (B, Wpad) f32 word mask."""
    b, w, d = s.shape
    s16 = s.astype(jnp.bfloat16)                        # cast BEFORE pad/reshape
    s_pad = jnp.pad(s16, ((0, 0), (0, wp - w), (0, 0)))
    # PyTorch reference: cap_len == 0 -> use all W words, else truncate to cap_len.
    eff = jnp.where(lens > 0, lens, w).astype(jnp.int32)
    w_ids = jnp.arange(wp, dtype=jnp.int32)[None, :]
    mask = jnp.where(w_ids < eff[:, None], 0.0, _NEG_BIG).astype(jnp.float32)
    return s_pad.reshape(b * wp, d), mask


def _objects_t(x, brp):
    """(B, R, D) objects -> (D, BRp) bf16, pre-transposed, lane-padded to BRp."""
    b, r, d = x.shape
    xt = x.astype(jnp.bfloat16).reshape(b * r, d).T     # cast BEFORE transpose/pad
    return jnp.pad(xt, ((0, 0), (0, brp - b * r)))


@functools.partial(jax.jit, static_argnames=("predicate_score_rate", "margin",
                                             "max_violation"))
def contrastive_loss(im, obj_nums, s, cap_lens,
                     pred, pred_nums, s_pred, spred_lens,
                     predicate_score_rate=1.0, margin=0.0, max_violation=False):
    b, r1, d = im.shape
    r2 = pred.shape[1]
    w1 = s.shape[1]
    w2 = s_pred.shape[1]

    # common word padding (multiple of 8 sublanes) so both paths stack into one operand
    wp = max(_round_up(w1, 8), _round_up(w2, 8))

    cap1, wm1 = _captions_flat(s, cap_lens, wp)
    cap2, wm2 = _captions_flat(s_pred, spred_lens, wp)
    caps = jnp.stack([cap1, cap2], axis=0)              # (2, B*Wpad, D) bf16
    wmask = jnp.stack([wm1, wm2], axis=0)               # (2, B, Wpad) f32

    inv = jnp.stack([
        1.0 / (obj_nums.astype(jnp.float32) + 1e-6),
        float(predicate_score_rate) / (pred_nums.astype(jnp.float32) + 1e-6),
    ], axis=0)[:, None, :]                              # (2, 1, B) f32

    vmem_limit = _VMEM_LIMIT
    tile_n = _pick_tile_n(b, wp, max(b * r1, b * r2), vmem_limit)

    br1p = _round_up(b * r1, tile_n)
    br2p = _round_up(b * r2, tile_n)
    nt1 = br1p // tile_n
    nt2 = br2p // tile_n
    obj_t = jnp.concatenate([_objects_t(im, br1p), _objects_t(pred, br2p)],
                            axis=1)                      # (D, BR1p + BR2p) bf16

    kernel = _make_kernel(b, wp, tile_n, nt1, r1, r2, float(margin),
                          bool(max_violation))

    def _path(n):
        # 0 for image-path tiles, 1 for predicate-path tiles (static split point nt1)
        return jnp.where(n < nt1, 0, 1)

    in_specs = [
        pl.BlockSpec((None, b * wp, d), lambda n: (_path(n), 0, 0)),  # captions (path-resident)
        pl.BlockSpec((None, b, wp),     lambda n: (_path(n), 0, 0)),  # lane-dense word mask
        pl.BlockSpec((None, 1, b),      lambda n: (_path(n), 0, 0)),  # per-path inv counts
        pl.BlockSpec((d, tile_n),       lambda n: (0, n)),            # object tile (streamed)
    ]
    out_spec = pl.BlockSpec((1, 1), lambda n: (0, 0))

    operands = (caps, wmask, inv, obj_t)
    flops = 2 * (b * wp) * d * (br1p + br2p) + 2 * b * (br1p + br2p) * b
    bytes_accessed = sum(int(a.size) * a.dtype.itemsize for a in operands) + 4

    out = pl.pallas_call(
        kernel,
        out_shape=jax.ShapeDtypeStruct((1, 1), jnp.float32),
        grid_spec=pltpu.PrefetchScalarGridSpec(
            num_scalar_prefetch=0,
            grid=(nt1 + nt2,),
            in_specs=in_specs,
            out_specs=out_spec,
            scratch_shapes=[pltpu.VMEM((b, b), jnp.float32)],   # scores^T accumulator
        ),
        cost_estimate=pl.CostEstimate(flops=flops, transcendentals=0,
                                      bytes_accessed=bytes_accessed),
        compiler_params=pltpu.CompilerParams(
            dimension_semantics=("arbitrary",),   # object axis is a reduction into scores
            vmem_limit_bytes=vmem_limit,
        ),
    )(*operands)
    return out[0, 0]


if __name__ == "__main__":
    key = jax.random.PRNGKey(0)
    k1, k2, k3, k4 = jax.random.split(key, 4)

    B, R, W, Rp, Wq, D = 2, 6, 8, 5, 7, 32
    im = jax.random.normal(k1, (B, R, D), jnp.float32)        # image object features
    s = jax.random.normal(k2, (B, W, D), jnp.float32)         # caption word features
    pred = jax.random.normal(k3, (B, Rp, D), jnp.float32)     # predicate features
    s_pred = jax.random.normal(k4, (B, Wq, D), jnp.float32)   # predicate caption features

    im_l = jnp.array([4, 6], jnp.int32)        # obj_nums per image
    s_l = jnp.array([5, 8], jnp.int32)         # caption lengths
    pred_l = jnp.array([3, 5], jnp.int32)      # predicate counts
    s_pred_l = jnp.array([7, 4], jnp.int32)    # predicate caption lengths

    loss = contrastive_loss(im, im_l, s, s_l, pred, pred_l, s_pred, s_pred_l)
    jax.block_until_ready(loss)
    print("KERNEL_OK")
</pallas_src>

<mosaic_0001>
module attributes {stable_mosaic.version = 11 : i64} {
  func.func @kernel(%arg0: i32, %arg1: memref<1x16x32xbf16, #tpu.memory_space<vmem>>, %arg2: memref<1x2x8xf32, #tpu.memory_space<vmem>>, %arg3: memref<1x1x2xf32, #tpu.memory_space<vmem>>, %arg4: memref<32x128xbf16, #tpu.memory_space<vmem>>, %arg5: memref<1x1xf32, #tpu.memory_space<vmem>>, %arg6: memref<2x2xf32, #tpu.memory_space<vmem>>) attributes {dimension_semantics = [#tpu.dimension_semantics<arbitrary>], iteration_bounds = array<i64: 2>, scalar_prefetch = 0 : i64, scratch_operands = 1 : i64, tpu.core_type = #tpu.core_type<tc>, window_params = [{transform_indices = @transform_0, window_bounds = array<i64: 1, 16, 32>}, {transform_indices = @transform_1, window_bounds = array<i64: 1, 2, 8>}, {transform_indices = @transform_2, window_bounds = array<i64: 1, 1, 2>}, {transform_indices = @transform_3, window_bounds = array<i64: 32, 128>}, {pipeline_mode = #tpu.pipeline_mode<synchronous>, transform_indices = @transform_4, window_bounds = array<i64: 1, 1>}]} {
    %c0_i32 = arith.constant 0 : i32
    %0 = arith.cmpi eq, %arg0, %c0_i32 : i32
    %1 = arith.extui %0 : i1 to i32
    %c0_i32_0 = arith.constant 0 : i32
    %2 = arith.cmpi ne, %1, %c0_i32_0 : i32
    scf.if %2 {
      %cst_22 = arith.constant 0.000000e+00 : f32
      %48 = vector.broadcast %cst_22 : f32 to vector<2x2xf32>
      %c0_23 = arith.constant 0 : index
      %c0_24 = arith.constant 0 : index
      %49 = vector.load %arg6[%c0_23, %c0_24] : memref<2x2xf32, #tpu.memory_space<vmem>>, vector<2x2xf32>
      tpu.vector_store %arg6[%c0_23, %c0_24], %48 {strides = array<i32>} : memref<2x2xf32, #tpu.memory_space<vmem>>, vector<2x2xf32>,
    } else {
    }
    %c0 = arith.constant 0 : index
    %c0_1 = arith.constant 0 : index
    %c0_2 = arith.constant 0 : index
    %3 = vector.load %arg1[%c0, %c0_1, %c0_2] : memref<1x16x32xbf16, #tpu.memory_space<vmem>>, vector<1x16x32xbf16>
    %4 = vector.shape_cast %3 : vector<1x16x32xbf16> to vector<16x32xbf16>
    %c0_3 = arith.constant 0 : index
    %c0_4 = arith.constant 0 : index
    %5 = vector.load %arg4[%c0_3, %c0_4] : memref<32x128xbf16, #tpu.memory_space<vmem>>, vector<32x128xbf16>
    %cst = arith.constant dense<0.000000e+00> : vector<16x128xf32>
    %6 = tpu.matmul %4, %5, %cst {dimension_numbers = #tpu.dot_dimension_numbers<[1], [0], [0], [1], [0, 0, 1, 1], [], []>} : vector<16x32xbf16>, vector<32x128xbf16>, vector<16x128xf32> -> vector<16x128xf32>
    %7 = vector.shape_cast %6 : vector<16x128xf32> to vector<2x8x128xf32>
    %c0_5 = arith.constant 0 : index
    %c0_6 = arith.constant 0 : index
    %c0_7 = arith.constant 0 : index
    %8 = vector.load %arg2[%c0_5, %c0_6, %c0_7] : memref<1x2x8xf32, #tpu.memory_space<vmem>>, vector<1x2x8xf32>
    %9 = vector.shape_cast %8 : vector<1x2x8xf32> to vector<2x8xf32>
    %10 = vector.shape_cast %9 : vector<2x8xf32> to vector<2x8x1xf32>
    %11 = vector.broadcast %10 : vector<2x8x1xf32> to vector<2x8x128xf32>
    %12 = arith.addf %7, %11 : vector<2x8x128xf32>
    %cst_8 = arith.constant dense<0xFF800000> : vector<2x128xf32>
    %13 = vector.multi_reduction <maximumf>, %12, %cst_8 [1] : vector<2x8x128xf32> to vector<2x128xf32>
    %14 = tpu.iota {dimensions = array<i32: 0>} : vector<128x2xi32>
    %15 = tpu.iota {dimensions = array<i32: 1>} : vector<128x2xi32>
    %c1_i32 = arith.constant 1 : i32
    %16 = arith.cmpi sge, %arg0, %c1_i32 : i32
    %c1_i32_9 = arith.constant 1 : i32
    %17 = arith.subi %arg0, %c1_i32_9 : i32
    %c128_i32 = arith.constant 128 : i32
    %18 = arith.muli %17, %c128_i32 : i32
    %c128_i32_10 = arith.constant 128 : i32
    %19 = arith.muli %arg0, %c128_i32_10 : i32
    %20 = arith.select %16, %18, %19 : i32
    %21 = vector.broadcast %20 : i32 to vector<128x2xi32>
    %22 = arith.addi %21, %14 : vector<128x2xi32>
    %c5_i32 = arith.constant 5 : i32
    %c6_i32 = arith.constant 6 : i32
    %23 = arith.select %16, %c5_i32, %c6_i32 : i32
    %c10_i32 = arith.constant 10 : i32
    %c12_i32 = arith.constant 12 : i32
    %24 = arith.select %16, %c10_i32, %c12_i32 : i32
    %25 = vector.broadcast %23 : i32 to vector<128x2xi32>
    %26 = arith.muli %15, %25 : vector<128x2xi32>
    %27 = arith.cmpi sge, %22, %26 : vector<128x2xi32>
    %28 = vector.broadcast %23 : i32 to vector<128x2xi32>
    %29 = arith.addi %26, %28 : vector<128x2xi32>
    %30 = arith.cmpi slt, %22, %29 : vector<128x2xi32>
    %31 = arith.andi %27, %30 : vector<128x2xi1>
    %32 = vector.broadcast %24 : i32 to vector<128x2xi32>
    %33 = arith.cmpi slt, %22, %32 : vector<128x2xi32>
    %34 = arith.andi %31, %33 : vector<128x2xi1>
    %c0_11 = arith.constant 0 : index
    %c0_12 = arith.constant 0 : index
    %c0_13 = arith.constant 0 : index
    %35 = vector.load %arg3[%c0_11, %c0_12, %c0_13] : memref<1x1x2xf32, #tpu.memory_space<vmem>>, vector<1x1x2xf32>
    %36 = vector.shape_cast %35 : vector<1x1x2xf32> to vector<1x2xf32>
    %cst_14 = arith.constant 0.000000e+00 : f32
    %37 = vector.shape_cast %36 : vector<1x2xf32> to vector<1x2xf32>
    %38 = vector.broadcast %37 : vector<1x2xf32> to vector<128x2xf32>
    %39 = vector.broadcast %cst_14 : f32 to vector<128x2xf32>
    %40 = arith.select %34, %38, %39 : vector<128x2xi1>, vector<128x2xf32>
    %c0_15 = arith.constant 0 : index
    %c0_16 = arith.constant 0 : index
    %41 = vector.load %arg6[%c0_15, %c0_16] : memref<2x2xf32, #tpu.memory_space<vmem>>, vector<2x2xf32>
    %cst_17 = arith.constant dense<0.000000e+00> : vector<2x2xf32>
    %42 = tpu.matmul %13, %40, %cst_17 {dimension_numbers = #tpu.dot_dimension_numbers<[1], [0], [0], [1], [0, 0, 1, 1], [], []>} : vector<2x128xf32>, vector<128x2xf32>, vector<2x2xf32> -> vector<2x2xf32>
    %43 = arith.addf %41, %42 : vector<2x2xf32>
    %c0_18 = arith.constant 0 : index
    %c0_19 = arith.constant 0 : index
    %44 = vector.load %arg6[%c0_18, %c0_19] : memref<2x2xf32, #tpu.memory_space<vmem>>, vector<2x2xf32>
    tpu.vector_store %arg6[%c0_18, %c0_19], %43 {strides = array<i32>} : memref<2x2xf32, #tpu.memory_space<vmem>>, vector<2x2xf32>,
    %c1_i32_20 = arith.constant 1 : i32
    %45 = arith.cmpi eq, %arg0, %c1_i32_20 : i32
    %46 = arith.extui %45 : i1 to i32
    %c0_i32_21 = arith.constant 0 : i32
    %47 = arith.cmpi ne, %46, %c0_i32_21 : i32
    scf.if %47 {
      %c0_22 = arith.constant 0 : index
      %c0_23 = arith.constant 0 : index
      %48 = vector.load %arg6[%c0_22, %c0_23] : memref<2x2xf32, #tpu.memory_space<vmem>>, vector<2x2xf32>
      %49 = tpu.iota {dimensions = array<i32: 0>} : vector<2x2xi32>
      %50 = tpu.iota {dimensions = array<i32: 1>} : vector<2x2xi32>
      %51 = arith.cmpi eq, %49, %50 : vector<2x2xi32>
      %cst_24 = arith.constant 0.000000e+00 : f32
      %52 = vector.broadcast %cst_24 : f32 to vector<2x2xf32>
      %53 = arith.select %51, %48, %52 : vector<2x2xi1>, vector<2x2xf32>
      %cst_25 = arith.constant dense<0.000000e+00> : vector<2xf32>
      %54 = vector.multi_reduction <add>, %53, %cst_25 [1] : vector<2x2xf32> to vector<2xf32>
      %55 = vector.shape_cast %54 : vector<2xf32> to vector<2x1xf32>
      %cst_26 = arith.constant dense<0.000000e+00> : vector<2xf32>
      %56 = vector.multi_reduction <add>, %53, %cst_26 [0] : vector<2x2xf32> to vector<2xf32>
      %57 = vector.shape_cast %56 : vector<2xf32> to vector<1x2xf32>
      %cst_27 = arith.constant 0.000000e+00 : f32
      %58 = vector.broadcast %cst_27 : f32 to vector<2x2xf32>
      %59 = arith.addf %58, %48 : vector<2x2xf32>
      %60 = vector.broadcast %55 : vector<2x1xf32> to vector<2x2xf32>
      %61 = arith.subf %59, %60 : vector<2x2xf32>
      %cst_28 = arith.constant 0.000000e+00 : f32
      %62 = vector.broadcast %cst_28 : f32 to vector<2x2xf32>
      %63 = arith.maximumf %61, %62 : vector<2x2xf32>
      %cst_29 = arith.constant 0.000000e+00 : f32
      %64 = vector.broadcast %cst_29 : f32 to vector<2x2xf32>
      %65 = arith.select %51, %64, %63 : vector<2x2xi1>, vector<2x2xf32>
      %cst_30 = arith.constant 0.000000e+00 : f32
      %66 = vector.broadcast %cst_30 : f32 to vector<2x2xf32>
      %67 = arith.addf %66, %48 : vector<2x2xf32>
      %68 = vector.broadcast %57 : vector<1x2xf32> to vector<2x2xf32>
      %69 = arith.subf %67, %68 : vector<2x2xf32>
      %cst_31 = arith.constant 0.000000e+00 : f32
      %70 = vector.broadcast %cst_31 : f32 to vector<2x2xf32>
      %71 = arith.maximumf %69, %70 : vector<2x2xf32>
      %cst_32 = arith.constant 0.000000e+00 : f32
      %72 = vector.broadcast %cst_32 : f32 to vector<2x2xf32>
      %73 = arith.select %51, %72, %71 : vector<2x2xi1>, vector<2x2xf32>
      %74 = arith.addf %65, %73 : vector<2x2xf32>
      %cst_33 = arith.constant dense<0.000000e+00> : vector<2xf32>
      %75 = vector.multi_reduction <add>, %74, %cst_33 [1] : vector<2x2xf32> to vector<2xf32>
      %76 = vector.shape_cast %75 : vector<2xf32> to vector<2x1xf32>
      %cst_34 = arith.constant dense<0.000000e+00> : vector<1xf32>
      %77 = vector.multi_reduction <add>, %76, %cst_34 [0] : vector<2x1xf32> to vector<1xf32>
      %78 = vector.shape_cast %77 : vector<1xf32> to vector<1x1xf32>
      %cst_35 = arith.constant 4.000000e+00 : f32
      %79 = vector.broadcast %cst_35 : f32 to vector<1x1xf32>
      %80 = arith.divf %78, %79 : vector<1x1xf32>
      %c0_36 = arith.constant 0 : index
      %c0_37 = arith.constant 0 : index
      %81 = vector.load %arg5[%c0_36, %c0_37] : memref<1x1xf32, #tpu.memory_space<vmem>>, vector<1x1xf32>
      tpu.vector_store %arg5[%c0_36, %c0_37], %80 {strides = array<i32>} : memref<1x1xf32, #tpu.memory_space<vmem>>, vector<1x1xf32>,
    } else {
    }
    return
  }
  func.func @transform_0(%arg0: i32) -> (i32, i32, i32) {
    %c1_i32 = arith.constant 1 : i32
    %0 = arith.cmpi slt, %arg0, %c1_i32 : i32
    %c0_i32 = arith.constant 0 : i32
    %c1_i32_0 = arith.constant 1 : i32
    %1 = arith.select %0, %c0_i32, %c1_i32_0 : i32
    %c0_i32_1 = arith.constant 0 : i32
    %c0_i32_2 = arith.constant 0 : i32
    %c0_i32_3 = arith.constant 0 : i32
    return %1, %c0_i32_1, %c0_i32_2 : i32, i32, i32
  }
  func.func @transform_1(%arg0: i32) -> (i32, i32, i32) {
    %c1_i32 = arith.constant 1 : i32
    %0 = arith.cmpi slt, %arg0, %c1_i32 : i32
    %c0_i32 = arith.constant 0 : i32
    %c1_i32_0 = arith.constant 1 : i32
    %1 = arith.select %0, %c0_i32, %c1_i32_0 : i32
    %c0_i32_1 = arith.constant 0 : i32
    %c0_i32_2 = arith.constant 0 : i32
    %c0_i32_3 = arith.constant 0 : i32
    return %1, %c0_i32_1, %c0_i32_2 : i32, i32, i32
  }
  func.func @transform_2(%arg0: i32) -> (i32, i32, i32) {
    %c1_i32 = arith.constant 1 : i32
    %0 = arith.cmpi slt, %arg0, %c1_i32 : i32
    %c0_i32 = arith.constant 0 : i32
    %c1_i32_0 = arith.constant 1 : i32
    %1 = arith.select %0, %c0_i32, %c1_i32_0 : i32
    %c0_i32_1 = arith.constant 0 : i32
    %c0_i32_2 = arith.constant 0 : i32
    %c0_i32_3 = arith.constant 0 : i32
    return %1, %c0_i32_1, %c0_i32_2 : i32, i32, i32
  }
  func.func @transform_3(%arg0: i32) -> (i32, i32) {
    %c0_i32 = arith.constant 0 : i32
    %c0_i32_0 = arith.constant 0 : i32
    return %c0_i32, %arg0 : i32, i32
  }
  func.func @transform_4(%arg0: i32) -> (i32, i32) {
    %c0_i32 = arith.constant 0 : i32
    %c0_i32_0 = arith.constant 0 : i32
    %c0_i32_1 = arith.constant 0 : i32
    return %c0_i32, %c0_i32_0 : i32, i32
  }
}

</mosaic_0001>

<llo_original>
// kernel: contrastive_loss.1
$region0: #{contrastive_loss.1}
  #allocation0 [shape = 'u32[]', space=smem, size = 0x4, offset = 0x4, fixed_abs, tag = 'smem constant byte address 0x4 - core index']
  #allocation1 [shape = 'u32[72,128]{1,0:T(1,128)}', space=vmem, size = 0x9000, scoped, tag = 'internal scratch']
  #allocation2 [shape = 'f32[2,2]{1,0:T(2,128)}', space=vmem, size = 0x400, scoped, tag = 'scratch operand']
  %s0 = inlined_call_operand.vmem [shape: bf16[2,16,32], index: 0, kind: input, shape index: {}]
  %s1 = inlined_call_operand.vmem [shape: f32[2,2,8], index: 1, kind: input, shape index: {}]
  %s2 = inlined_call_operand.vmem [shape: f32[2,1,2], index: 2, kind: input, shape index: {}]
  %s3 = inlined_call_operand.vmem [shape: bf16[32,256], index: 3, kind: input, shape index: {}]
  %s4 = inlined_call_operand.hbm [shape: f32[1,1], index: 4, kind: output, shape index: {}]
  %s5 = sld [smem:[#allocation0]]
  $region98: #{contrastive_loss.1} parent=0
    _
  %s7 = ssub.s32 1, %s5
  %s8 = scalar_select 0, %s7, %s5
  $region1: #{contrastive_loss.1} parent=0
    #allocation3 [shape = 'u8[16384]{0}', space=vmem, size = 0x4000, scoped, tag = 'input window, operand 3']
    #allocation4 [shape = 'u8[512]{0}', space=vmem, size = 0x400, scoped, tag = 'output window, operand 0, single buffered']
    #allocation5 [shape = 's32[2]{0}', space=sflag, size = 0x8, scoped, tag = 'scoped memory for contrastive_loss.1']
    %9 = vsyncpa [#allocation5], 0
    loop: start=0, step=1, limit=4
    $region2: #{contrastive_loss.1} parent=1 // loop_pre_header
      _
    $region3: #{contrastive_loss.1} parent=1 // loop_header
      %s11 = sphi 0, %s15
      %p12 = scmp.ge.s32.totalorder %s11, 4
      %s25 = sphi 0, %s27
      %s28 = sphi 0, %s25
      %s29 = sphi 0, %s28
      %s45 = sphi 0, %s29
      %s55 = sphi 0, %s57
      %s58 = sphi 0, %s55
      %s59 = sphi 0, %s58
      %s75 = sphi 0, %s59
      %s85 = sphi 0, %s87
      %s88 = sphi 0, %s85
      %s89 = sphi 0, %s88
      %s105 = sphi 0, %s89
      %s111 = sphi 0, %s113
      %s114 = sphi 0, %s111
      %s115 = sphi 0, %s114
      %s131 = sphi 0, %s115
      %s135 = sphi 0, %s135
      %s137 = sphi 0, %s135
      %s138 = sphi 0, %s137
      %s152 = sphi 0, %s138
    $region4: #{contrastive_loss.1} parent=1 // loop_header_branch
      %14 = sbr.rel (%p12) target = $region8
    $region5: #{contrastive_loss.1} parent=1 // loop_body
      %s16 = ssub.s32 %s11, 1
      %s17 = ssub.s32 %s11, 2
      %s18 = sadd.s32 %s11, 1
      %p19 = scmp.ge.s32.totalorder %s11, 1
      %s20 = scalar_select %p19, 1, 0
      %p21 = scmp.ge.s32.totalorder %s18, 1
      %s22 = scalar_select %p21, 1, 0
      %s23 = ssub.s32 %s20, %s22
      %p24 = scmp.eq.s32.totalorder %s23, 0
      %s26 = sadd.s32 %s25, 1
      %s27 = scalar_select %p24, %s25, %s26
      %p30 = pneg %p24
      %p31 = scmp.eq.s32.totalorder %s11, 1
      %p32 = por %p30, %p31
      %p33 = scmp.ne.s32.totalorder %s25, %s28
      %p34 = scmp.eq.s32.totalorder %s11, 0
      %p35 = por %p33, %p34
      %p36 = scmp.ne.s32.totalorder %s25, %s28
      %p37 = scmp.eq.s32.totalorder %s16, 1
      %p38 = por %p36, %p37
      %p39 = scmp.ne.s32.totalorder %s28, %s29
      %p40 = scmp.eq.s32.totalorder %s16, 0
      %p41 = por %p39, %p40
      %p42 = scmp.ne.s32.totalorder %s28, %s29
      %p43 = scmp.eq.s32.totalorder %s17, 1
      %p44 = por %p42, %p43
      %p46 = scmp.ne.s32.totalorder %s29, %s45
      %p47 = scmp.eq.s32.totalorder %s17, 0
      %p48 = por %p46, %p47
      %p49 = scmp.ge.s32.totalorder %s11, 1
      %s50 = scalar_select %p49, 1, 0
      %p51 = scmp.ge.s32.totalorder %s18, 1
      %s52 = scalar_select %p51, 1, 0
      %s53 = ssub.s32 %s50, %s52
      %p54 = scmp.eq.s32.totalorder %s53, 0
      %s56 = sadd.s32 %s55, 1
      %s57 = scalar_select %p54, %s55, %s56
      %p60 = pneg %p54
      %p61 = scmp.eq.s32.totalorder %s11, 1
      %p62 = por %p60, %p61
      %p63 = scmp.ne.s32.totalorder %s55, %s58
      %p64 = scmp.eq.s32.totalorder %s11, 0
      %p65 = por %p63, %p64
      %p66 = scmp.ne.s32.totalorder %s55, %s58
      %p67 = scmp.eq.s32.totalorder %s16, 1
      %p68 = por %p66, %p67
      %p69 = scmp.ne.s32.totalorder %s58, %s59
      %p70 = scmp.eq.s32.totalorder %s16, 0
      %p71 = por %p69, %p70
      %p72 = scmp.ne.s32.totalorder %s58, %s59
      %p73 = scmp.eq.s32.totalorder %s17, 1
      %p74 = por %p72, %p73
      %p76 = scmp.ne.s32.totalorder %s59, %s75
      %p77 = scmp.eq.s32.totalorder %s17, 0
      %p78 = por %p76, %p77
      %p79 = scmp.ge.s32.totalorder %s11, 1
      %s80 = scalar_select %p79, 1, 0
      %p81 = scmp.ge.s32.totalorder %s18, 1
      %s82 = scalar_select %p81, 1, 0
      %s83 = ssub.s32 %s80, %s82
      %p84 = scmp.eq.s32.totalorder %s83, 0
      %s86 = sadd.s32 %s85, 1
      %s87 = scalar_select %p84, %s85, %s86
      %p90 = pneg %p84
      %p91 = scmp.eq.s32.totalorder %s11, 1
      %p92 = por %p90, %p91
      %p93 = scmp.ne.s32.totalorder %s85, %s88
      %p94 = scmp.eq.s32.totalorder %s11, 0
      %p95 = por %p93, %p94
      %p96 = scmp.ne.s32.totalorder %s85, %s88
      %p97 = scmp.eq.s32.totalorder %s16, 1
      %p98 = por %p96, %p97
      %p99 = scmp.ne.s32.totalorder %s88, %s89
      %p100 = scmp.eq.s32.totalorder %s16, 0
      %p101 = por %p99, %p100
      %p102 = scmp.ne.s32.totalorder %s88, %s89
      %p103 = scmp.eq.s32.totalorder %s17, 1
      %p104 = por %p102, %p103
      %p106 = scmp.ne.s32.totalorder %s89, %s105
      %p107 = scmp.eq.s32.totalorder %s17, 0
      %p108 = por %p106, %p107
      %s109 = ssub.s32 %s11, %s18
      %p110 = scmp.eq.s32.totalorder %s109, 0
      %s112 = sadd.s32 %s111, 1
      %s113 = scalar_select %p110, %s111, %s112
      %p116 = pneg %p110
      %p117 = scmp.eq.s32.totalorder %s11, 1
      %p118 = por %p116, %p117
      %p119 = scmp.ne.s32.totalorder %s111, %s114
      %p120 = scmp.eq.s32.totalorder %s11, 0
      %p121 = por %p119, %p120
      %p122 = scmp.ne.s32.totalorder %s111, %s114
      %p123 = scmp.eq.s32.totalorder %s16, 1
      %p124 = por %p122, %p123
      %p125 = scmp.ne.s32.totalorder %s114, %s115
      %p126 = scmp.eq.s32.totalorder %s16, 0
      %p127 = por %p125, %p126
      %p128 = scmp.ne.s32.totalorder %s114, %s115
      %p129 = scmp.eq.s32.totalorder %s17, 1
      %p130 = por %p128, %p129
      %p132 = scmp.ne.s32.totalorder %s115, %s131
      %p133 = scmp.eq.s32.totalorder %s17, 0
      %p134 = por %p132, %p133
      %s136 = sadd.s32 %s135, 1
      %p139 = scmp.eq.s32.totalorder %s11, 1
      %p140 = scmp.ne.s32.totalorder %s135, %s137
      %p141 = scmp.eq.s32.totalorder %s11, 0
      %p142 = por %p140, %p141
      %p143 = scmp.ne.s32.totalorder %s135, %s137
      %p144 = scmp.eq.s32.totalorder %s16, 1
      %p145 = por %p143, %p144
      %p146 = scmp.ne.s32.totalorder %s137, %s138
      %p147 = scmp.eq.s32.totalorder %s16, 0
      %p148 = por %p146, %p147
      %p149 = scmp.ne.s32.totalorder %s137, %s138
      %p150 = scmp.eq.s32.totalorder %s17, 1
      %p151 = por %p149, %p150
      %p153 = scmp.ne.s32.totalorder %s138, %s152
      %p154 = scmp.eq.s32.totalorder %s17, 0
      %p155 = por %p153, %p154
      %p156 = scmp.le.s32.totalorder 1, %s11
      %p157 = scmp.lt.s32.totalorder %s11, 3
      %p158 = pnand %p156, %p157
      %p159 = pneg %p158
      // Predicated region
      $region9: #{contrastive_loss.1} parent=5 // pred_check
        _
      $region10: #{contrastive_loss.1} parent=5 // pred_check_branch
        %161 = sbr.rel (%p158) target = $region12
      $region11: #{contrastive_loss.1} parent=5 // pred_region
        %s162 = ssub.s32 %s11, 1
      $region12: #{contrastive_loss.1} parent=5 // pred_fallthru
        _
      %p163 = scmp.lt.s32.totalorder %s11, 2
      // Predicated region
      $region13: #{contrastive_loss.1} parent=5 // pred_check
        %p164 = pneg %p163
      $region14: #{contrastive_loss.1} parent=5 // pred_check_branch
        %166 = sbr.rel (%p164) target = $region16
      $region15: #{contrastive_loss.1} parent=5 // pred_region
        // Predicated region
        $region17: #{contrastive_loss.1} parent=15 // pred_check
          %p167 = pneg %p35
        $region18: #{contrastive_loss.1} parent=15 // pred_check_branch
          %169 = sbr.rel (%p167) target = $region20
        $region19: #{contrastive_loss.1} parent=15 // pred_region
          %p170 = scmp.ge.s32.totalorder %s11, 1
          %s171 = scalar_select %p170, 1, 0
          %p172 = scmp.lt.s32.totalorder %s171, 1
          %s173 = scalar_select %p172, %s171, 1
          %s174 = smul.addr %s173, 2
          %s175 = smul.addr %s174, 4
          %s176 = scalar_lea.vmem %s0, %s175
          %p177 = scmp.ge.s32.totalorder %s11, 1
          %s178 = scalar_select %p177, 1, 0
        $region20: #{contrastive_loss.1} parent=15 // pred_fallthru
          _
        // Predicated region
        $region21: #{contrastive_loss.1} parent=15 // pred_check
          %p179 = pneg %p65
        $region22: #{contrastive_loss.1} parent=15 // pred_check_branch
          %181 = sbr.rel (%p179) target = $region24
        $region23: #{contrastive_loss.1} parent=15 // pred_region
          %p182 = scmp.ge.s32.totalorder %s11, 1
          %s183 = scalar_select %p182, 1, 0
          %p184 = scmp.lt.s32.totalorder %s183, 1
          %s185 = scalar_select %p184, %s183, 1
          %s186 = smul.addr %s185, 2
          %s187 = scalar_lea.vmem %s1, %s186
          %p188 = scmp.ge.s32.totalorder %s11, 1
          %s189 = scalar_select %p188, 1, 0
        $region24: #{contrastive_loss.1} parent=15 // pred_fallthru
          _
        // Predicated region
        $region25: #{contrastive_loss.1} parent=15 // pred_check
          %p190 = pneg %p95
        $region26: #{contrastive_loss.1} parent=15 // pred_check_branch
          %192 = sbr.rel (%p190) target = $region28
        $region27: #{contrastive_loss.1} parent=15 // pred_region
          %p193 = scmp.ge.s32.totalorder %s11, 1
          %s194 = scalar_select %p193, 1, 0
          %p195 = scmp.lt.s32.totalorder %s194, 1
          %s196 = scalar_select %p195, %s194, 1
          %s197 = scalar_lea.vmem %s2, %s196
          %p198 = scmp.ge.s32.totalorder %s11, 1
          %s199 = scalar_select %p198, 1, 0
        $region28: #{contrastive_loss.1} parent=15 // pred_fallthru
          _
        // Predicated region
        $region29: #{contrastive_loss.1} parent=15 // pred_check
          %p200 = pneg %p121
        $region30: #{contrastive_loss.1} parent=15 // pred_check_branch
          %202 = sbr.rel (%p200) target = $region32
        $region31: #{contrastive_loss.1} parent=15 // pred_region
          %s203 = sand.u32 %s111, 1
          %s204 = sand.u32 %s111, 1
          %s205 = smul.addr %s204, 16
          %s206 = scalar_lea.vmem [#allocation3], %s205
          %s207 = smul.addr %s11, 4
          %s208 = scalar_lea.vmem %s3, %s207
          // Predicated region
          $region33: #{contrastive_loss.1} parent=31 // pred_check
            _
          $region34: #{contrastive_loss.1} parent=31 // pred_check_branch
            %210 = sbr.rel (0) target = $region36
          $region35: #{contrastive_loss.1} parent=31 // pred_region
            // Predicated region
            $region37: #{contrastive_loss.1} parent=35 // pred_check
              _
            $region38: #{contrastive_loss.1} parent=35 // pred_check_branch
              %212 = sbr.rel target = $region40
            $region39: #{contrastive_loss.1} parent=35 // pred_region
              // Predicated region
              $region52: #{contrastive_loss.1} parent=39 // pred_check
                _
              $region53: #{contrastive_loss.1} parent=39 // pred_check_branch
                %234 = sbr.rel (0) target = $region55
              $region54: #{contrastive_loss.1} parent=39 // pred_region
                loop: start=0, step=1, limit=1
                $region56: #{contrastive_loss.1} parent=54 // loop_pre_header
                  _
                $region57: #{contrastive_loss.1} parent=54 // loop_header
                  %s236 = sphi 0, %s240
                  %p237 = scmp.ge.s32.totalorder %s236, 1
                  %s241 = sphi %s208, %s208
                  %s242 = sphi %s206, %s206
                $region58: #{contrastive_loss.1} parent=54 // loop_header_branch
                  %239 = sbr.rel (%p237) target = $region62
                $region59: #{contrastive_loss.1} parent=54 // loop_body
                  _
                $region60: #{contrastive_loss.1} parent=54 // loop_footer
                  %s240 = sadd.s32 1, %s236
                $region61: #{contrastive_loss.1} parent=54 // loop_footer_branch
                  %235 = sbr.rel target = $region57
                $region62: #{contrastive_loss.1} parent=54 // loop_exit
                  _
                %s244 = ssub.s32 16, 1
                loop: start=0, step=1, limit=1
                $region63: #{contrastive_loss.1} parent=54 // loop_pre_header
                  _
                $region64: #{contrastive_loss.1} parent=54 // loop_header
                  %s246 = sphi 0, %s250
                  %p247 = scmp.ge.s32.totalorder %s246, 1
                  %s251 = sphi %s208, %s208
                  %s252 = sphi %s206, %s206
                $region65: #{contrastive_loss.1} parent=54 // loop_header_branch
                  %249 = sbr.rel (%p247) target = $region69
                $region66: #{contrastive_loss.1} parent=54 // loop_body
                  %v253 = vld [vmem:[%s251] sm:%s244]
                  %254 = vst [vmem:[%s252] sm:%s244] %v253
                  %v255 = vld [vmem:[%s251 + $0x8] sm:%s244]
                  %256 = vst [vmem:[%s252 + $0x4] sm:%s244] %v255
                  %v257 = vld [vmem:[%s251 + $0x10] sm:%s244]
                  %258 = vst [vmem:[%s252 + $0x8] sm:%s244] %v257
                  %v259 = vld [vmem:[%s251 + $0x18] sm:%s244]
                  %260 = vst [vmem:[%s252 + $0xc] sm:%s244] %v259
                $region67: #{contrastive_loss.1} parent=54 // loop_footer
                  %s250 = sadd.s32 1, %s246
                $region68: #{contrastive_loss.1} parent=54 // loop_footer_branch
                  %245 = sbr.rel target = $region64
                $region69: #{contrastive_loss.1} parent=54 // loop_exit
                  _
              $region55: #{contrastive_loss.1} parent=39 // pred_fallthru
                _
            $region40: #{contrastive_loss.1} parent=35 // pred_fallthru
              _
            // Predicated region
            $region41: #{contrastive_loss.1} parent=35 // pred_check
              _
            $region42: #{contrastive_loss.1} parent=35 // pred_check_branch
              %214 = sbr.rel (0) target = $region44
            $region43: #{contrastive_loss.1} parent=35 // pred_region
              %s216 = ssub.s32 16, 1
              loop: start=0, step=1, limit=1
              $region45: #{contrastive_loss.1} parent=43 // loop_pre_header
                _
              $region46: #{contrastive_loss.1} parent=43 // loop_header
                %s218 = sphi 0, %s222
                %p219 = scmp.ge.s32.totalorder %s218, 1
                %s223 = sphi %s208, %s208
                %s224 = sphi %s206, %s206
              $region47: #{contrastive_loss.1} parent=43 // loop_header_branch
                %221 = sbr.rel (%p219) target = $region51
              $region48: #{contrastive_loss.1} parent=43 // loop_body
                %v225 = vld [vmem:[%s223] sm:%s216]
                %226 = vst [vmem:[%s224] sm:%s216] %v225
                %v227 = vld [vmem:[%s223 + $0x8] sm:%s216]
                %228 = vst [vmem:[%s224 + $0x4] sm:%s216] %v227
                %v229 = vld [vmem:[%s223 + $0x10] sm:%s216]
                %230 = vst [vmem:[%s224 + $0x8] sm:%s216] %v229
                %v231 = vld [vmem:[%s223 + $0x18] sm:%s216]
                %232 = vst [vmem:[%s224 + $0xc] sm:%s216] %v231
              $region49: #{contrastive_loss.1} parent=43 // loop_footer
                %s222 = sadd.s32 1, %s218
              $region50: #{contrastive_loss.1} parent=43 // loop_footer_branch
                %217 = sbr.rel target = $region46
              $region51: #{contrastive_loss.1} parent=43 // loop_exit
                _
            $region44: #{contrastive_loss.1} parent=35 // pred_fallthru
              _
          $region36: #{contrastive_loss.1} parent=31 // pred_fallthru
            _
          %261 = vnop
        $region32: #{contrastive_loss.1} parent=15 // pred_fallthru
          _
      $region16: #{contrastive_loss.1} parent=5 // pred_fallthru
        _
      %p262 = scmp.le.s32.totalorder 1, %s11
      %p263 = scmp.lt.s32.totalorder %s11, 3
      %p264 = pnand %p262, %p263
      %p265 = pneg %p264
      // Predicated region
      $region70: #{contrastive_loss.1} parent=5 // pred_check
        _
      $region71: #{contrastive_loss.1} parent=5 // pred_check_branch
        %267 = sbr.rel (%p264) target = $region73
      $region72: #{contrastive_loss.1} parent=5 // pred_region
        %s268 = ssub.s32 %s11, 1
        %s269 = sand.u32 %s114, 1
        %s270 = sand.u32 %s114, 1
        %s271 = smul.addr %s270, 16
        %s272 = scalar_lea.vmem [#allocation3], %s271
        // Predicated region
        $region74: #{contrastive_loss.1} parent=72 // pred_check
          %p273 = pneg %p127
        $region75: #{contrastive_loss.1} parent=72 // pred_check_branch
          %275 = sbr.rel (%p273) target = $region77
        $region76: #{contrastive_loss.1} parent=72 // pred_region
          _
        $region77: #{contrastive_loss.1} parent=72 // pred_fallthru
          _
        %p276 = scmp.ge.s32.totalorder %s16, 1
        %s277 = scalar_select %p276, 1, 0
        %p278 = scmp.lt.s32.totalorder %s277, 1
        %s279 = scalar_select %p278, %s277, 1
        %s280 = smul.addr %s279, 2
        %s281 = smul.addr %s280, 4
        %s282 = scalar_lea.vmem %s0, %s281
        %p283 = pneg %p41
        %p284 = pneg %p38
        %p285 = scmp.ge.s32.totalorder %s16, 1
        %s286 = scalar_select %p285, 1, 0
        %p287 = scmp.lt.s32.totalorder %s286, 1
        %s288 = scalar_select %p287, %s286, 1
        %s289 = smul.addr %s288, 2
        %s290 = scalar_lea.vmem %s1, %s289
        %p291 = pneg %p71
        %p292 = pneg %p68
        %p293 = scmp.ge.s32.totalorder %s16, 1
        %s294 = scalar_select %p293, 1, 0
        %p295 = scmp.lt.s32.totalorder %s294, 1
        %s296 = scalar_select %p295, %s294, 1
        %s297 = scalar_lea.vmem %s2, %s296
        %p298 = pneg %p101
        %p299 = pneg %p98
        %s300 = sand.u32 %s114, 1
        %s301 = sand.u32 %s114, 1
        %s302 = smul.addr %s301, 16
        %s303 = scalar_lea.vmem [#allocation3], %s302
        %p304 = pneg %p127
        %p305 = pneg %p124
        %p306 = pneg %p148
        %p307 = pneg %p145
        %p308 = scmp.ge.s32.totalorder %s16, 1
        %s309 = scalar_select %p308, 1, 0
        %p310 = scmp.lt.s32.totalorder %s309, 1
        %s311 = scalar_select %p310, %s309, 1
        %s312 = smul.addr %s311, 2
        %s313 = smul.addr %s312, 4
        %s314 = scalar_lea.vmem %s0, %s313
        %p315 = scmp.ge.s32.totalorder %s16, 1
        %s316 = scalar_select %p315, 1, 0
        %p317 = scmp.ge.s32.totalorder %s16, 1
        %s318 = scalar_select %p317, 1, 0
        %p319 = scmp.lt.s32.totalorder %s318, 1
        %s320 = scalar_select %p319, %s318, 1
        %s321 = smul.addr %s320, 2
        %s322 = scalar_lea.vmem %s1, %s321
        %p323 = scmp.ge.s32.totalorder %s16, 1
        %s324 = scalar_select %p323, 1, 0
        %p325 = scmp.ge.s32.totalorder %s16, 1
        %s326 = scalar_select %p325, 1, 0
        %p327 = scmp.lt.s32.totalorder %s326, 1
        %s328 = scalar_select %p327, %s326, 1
        %s329 = scalar_lea.vmem %s2, %s328
        %p330 = scmp.ge.s32.totalorder %s16, 1
        %s331 = scalar_select %p330, 1, 0
        %p333 = scmp.eq.s32.totalorder %s16, 0
        // Predicated region
        $region78: #{contrastive_loss.1} parent=72 // pred_check
          %p334 = pneg %p333
        $region79: #{contrastive_loss.1} parent=72 // pred_check_branch
          %336 = sbr.rel (%p334) target = $region81
        $region80: #{contrastive_loss.1} parent=72 // pred_region
          %vm337 = vcmask 9216
          %338 = vst.msk [vmem:[#allocation2] sm:$0x3] %vm337, 0.0
        $region81: #{contrastive_loss.1} parent=72 // pred_fallthru
          _
        %v339 = vld [vmem:[%s314] sm:$0xf]
        %v340 = vld [vmem:[%s314 + $0x4] sm:$0xf]
        %v341 = vld [vmem:[%s272] sm:$0xf]
        %v342 = vld [vmem:[%s272 + $0x4] sm:$0xf]
        %v343 = vld [vmem:[%s272 + $0x8] sm:$0xf]
        %v344 = vld [vmem:[%s272 + $0xc] sm:$0xf]
        %v347 = vunpack.c.l.b16 %v339
        %v348 = vunpack.c.l.b16 %v340
        %v349 = vpack.c.b16 %v348, %v347
        %v354 = vunpack.c.l.b16 %v341
        %v355 = vunpack.c.l.b16 %v342
        %v356 = vunpack.c.l.b16 %v343
        %v357 = vunpack.c.l.b16 %v344
        %v358 = vpack.c.b16 %v355, %v354
        %v359 = vpack.c.b16 %v357, %v356
        %vm362 = vcmask 261120
        %v364 = vsel %vm362, %v349, 0
        %366 = vmatpush.bf16.msra.mxu0 0
        %367 = vmatpush.bf16.msra.mxu0 0
        %368 = vmatpush.bf16.msra.mxu0 0
        %369 = vmatpush.bf16.msra.mxu0 0
        %370 = vmatpush.bf16.msra.mxu0 0
        %371 = vmatpush.bf16.msra.mxu0 0
        %372 = vmatpush.bf16.msra.mxu0 %v359
        %373 = vmatpush.bf16.msra.mxu0 %v358
        %374 = vmatmul.bf16.gmra.mxu0 %v364
        %v375 = vpop.f32.mrf.mxu0
        %v376 = vadd.f32 0.0, %v375
        %v377 = vpop.f32.mrf.mxu0
        %v378 = vadd.f32 0.0, %v377
        %379 = vdwg.mxu0
        %v380 = vld [vmem:[%s322] sm:$0x3]
        %v381 = vperm.slane %v380, 0
        %v382 = vlaneseq
        %v383 = vshrl.u32 %v382, 7
        %385 = vset.pattern.permute.xlu0 %v383
        %386 = vperm.xlu0 %385, %v381
        %v387 = vpop.permute.xlu0 %386
        %v388 = vperm.slane %v380, 1
        %v389 = vlaneseq
        %v390 = vshrl.u32 %v389, 7
        %392 = vset.pattern.permute.xlu0 %v390
        %393 = vperm.xlu0 %392, %v388
        %v394 = vpop.permute.xlu0 %393
        %v395 = vadd.f32 %v376, %v387
        %v396 = vadd.f32 %v378, %v394
        %v397 = vrot.slane %v395, 4
        %v398 = vmax.f32 %v395, %v397
        %v399 = vrot.slane %v398, 2
        %v400 = vmax.f32 %v398, %v399
        %v401 = vrot.slane %v400, 1
        %v402 = vmax.f32 %v400, %v401
        %v403 = vrot.slane %v396, 4
        %v404 = vmax.f32 %v396, %v403
        %v405 = vrot.slane %v404, 2
        %v406 = vmax.f32 %v404, %v405
        %v407 = vrot.slane %v406, 1
        %v408 = vmax.f32 %v406, %v407
        %v409 = vlaneseq
        %v410 = vshrl.u32 %v409, 7
        %v411 = vadd.s32 %v410, 8
        %v412 = vadd.s32 %v410, 16
        %v413 = vadd.s32 %v410, 24
        %v414 = vadd.s32 %v410, 32
        %v415 = vadd.s32 %v410, 40
        %v416 = vadd.s32 %v410, 48
        %v417 = vadd.s32 %v410, 56
        %v418 = vadd.s32 %v410, 64
        %v419 = vadd.s32 %v410, 72
        %v420 = vadd.s32 %v410, 80
        %v421 = vadd.s32 %v410, 88
        %v422 = vadd.s32 %v410, 96
        %v423 = vadd.s32 %v410, 104
        %v424 = vadd.s32 %v410, 112
        %v425 = vadd.s32 %v410, 120
        %v426 = vlaneseq
        %v427 = vand.u32 %v426, 127
        %p428 = scmp.ge.s32.totalorder %s16, 1
        %s429 = ssub.s32 %s16, 1
        %s430 = smul.u32 %s429, 128
        %s431 = smul.u32 %s16, 128
        %s432 = scalar_select %p428, %s430, %s431
        %v433 = vstv %s432
        %v434 = vadd.s32 %v433, %v410
        %v435 = vadd.s32 %v433, %v411
        %v436 = vadd.s32 %v433, %v412
        %v437 = vadd.s32 %v433, %v413
        %v438 = vadd.s32 %v433, %v414
        %v439 = vadd.s32 %v433, %v415
        %v440 = vadd.s32 %v433, %v416
        %v441 = vadd.s32 %v433, %v417
        %v442 = vadd.s32 %v433, %v418
        %v443 = vadd.s32 %v433, %v419
        %v444 = vadd.s32 %v433, %v420
        %v445 = vadd.s32 %v433, %v421
        %v446 = vadd.s32 %v433, %v422
        %v447 = vadd.s32 %v433, %v423
        %v448 = vadd.s32 %v433, %v424
        %v449 = vadd.s32 %v433, %v425
        %s450 = scalar_select %p428, 5, 6
        %s451 = scalar_select %p428, 10, 12
        %v452 = vstv %s450
        %v453 = vmul.u32 %v427, %v452
        %vm454 = vcmp.ge.s32.totalorder %v434, %v453
        %vm455 = vcmp.ge.s32.totalorder %v435, %v453
        %vm456 = vcmp.ge.s32.totalorder %v436, %v453
        %vm457 = vcmp.ge.s32.totalorder %v437, %v453
        %vm458 = vcmp.ge.s32.totalorder %v438, %v453
        %vm459 = vcmp.ge.s32.totalorder %v439, %v453
        %vm460 = vcmp.ge.s32.totalorder %v440, %v453
        %vm461 = vcmp.ge.s32.totalorder %v441, %v453
        %vm462 = vcmp.ge.s32.totalorder %v442, %v453
        %vm463 = vcmp.ge.s32.totalorder %v443, %v453
        %vm464 = vcmp.ge.s32.totalorder %v444, %v453
        %vm465 = vcmp.ge.s32.totalorder %v445, %v453
        %vm466 = vcmp.ge.s32.totalorder %v446, %v453
        %vm467 = vcmp.ge.s32.totalorder %v447, %v453
        %vm468 = vcmp.ge.s32.totalorder %v448, %v453
        %vm469 = vcmp.ge.s32.totalorder %v449, %v453
        %v470 = vadd.s32 %v453, %v452
        %vm471 = vcmp.lt.s32.totalorder %v434, %v470
        %vm472 = vcmp.lt.s32.totalorder %v435, %v470
        %vm473 = vcmp.lt.s32.totalorder %v436, %v470
        %vm474 = vcmp.lt.s32.totalorder %v437, %v470
        %vm475 = vcmp.lt.s32.totalorder %v438, %v470
        %vm476 = vcmp.lt.s32.totalorder %v439, %v470
        %vm477 = vcmp.lt.s32.totalorder %v440, %v470
        %vm478 = vcmp.lt.s32.totalorder %v441, %v470
        %vm479 = vcmp.lt.s32.totalorder %v442, %v470
        %vm480 = vcmp.lt.s32.totalorder %v443, %v470
        %vm481 = vcmp.lt.s32.totalorder %v444, %v470
        %vm482 = vcmp.lt.s32.totalorder %v445, %v470
        %vm483 = vcmp.lt.s32.totalorder %v446, %v470
        %vm484 = vcmp.lt.s32.totalorder %v447, %v470
        %vm485 = vcmp.lt.s32.totalorder %v448, %v470
        %vm486 = vcmp.lt.s32.totalorder %v449, %v470
        %vm487 = vmand %vm454, %vm471
        %vm488 = vmand %vm455, %vm472
        %vm489 = vmand %vm456, %vm473
        %vm490 = vmand %vm457, %vm474
        %vm491 = vmand %vm458, %vm475
        %vm492 = vmand %vm459, %vm476
        %vm493 = vmand %vm460, %vm477
        %vm494 = vmand %vm461, %vm478
        %vm495 = vmand %vm462, %vm479
        %vm496 = vmand %vm463, %vm480
        %vm497 = vmand %vm464, %vm481
        %vm498 = vmand %vm465, %vm482
        %vm499 = vmand %vm466, %vm483
        %vm500 = vmand %vm467, %vm484
        %vm501 = vmand %vm468, %vm485
        %vm502 = vmand %vm469, %vm486
        %v503 = vstv %s451
        %vm504 = vcmp.lt.s32.totalorder %v434, %v503
        %vm505 = vcmp.lt.s32.totalorder %v435, %v503
        %vm506 = vcmp.lt.s32.totalorder %v436, %v503
        %vm507 = vcmp.lt.s32.totalorder %v437, %v503
        %vm508 = vcmp.lt.s32.totalorder %v438, %v503
        %vm509 = vcmp.lt.s32.totalorder %v439, %v503
        %vm510 = vcmp.lt.s32.totalorder %v440, %v503
        %vm511 = vcmp.lt.s32.totalorder %v441, %v503
        %vm512 = vcmp.lt.s32.totalorder %v442, %v503
        %vm513 = vcmp.lt.s32.totalorder %v443, %v503
        %vm514 = vcmp.lt.s32.totalorder %v444, %v503
        %vm515 = vcmp.lt.s32.totalorder %v445, %v503
        %vm516 = vcmp.lt.s32.totalorder %v446, %v503
        %vm517 = vcmp.lt.s32.totalorder %v447, %v503
        %vm518 = vcmp.lt.s32.totalorder %v448, %v503
        %vm519 = vcmp.lt.s32.totalorder %v449, %v503
        %vm520 = vmand %vm487, %vm504
        %vm521 = vmand %vm488, %vm505
        %vm522 = vmand %vm489, %vm506
        %vm523 = vmand %vm490, %vm507
        %vm524 = vmand %vm491, %vm508
        %vm525 = vmand %vm492, %vm509
        %vm526 = vmand %vm493, %vm510
        %vm527 = vmand %vm494, %vm511
        %vm528 = vmand %vm495, %vm512
        %vm529 = vmand %vm496, %vm513
        %vm530 = vmand %vm497, %vm514
        %vm531 = vmand %vm498, %vm515
        %vm532 = vmand %vm499, %vm516
        %vm533 = vmand %vm500, %vm517
        %vm534 = vmand %vm501, %vm518
        %vm535 = vmand %vm502, %vm519
        %v536 = vld [vmem:[%s329] sm:$0x1]
        %v538 = vperm.slane %v536, 0
        %v540 = vsel %vm520, %v538, 0.0
        %v541 = vsel %vm521, %v538, 0.0
        %v542 = vsel %vm522, %v538, 0.0
        %v543 = vsel %vm523, %v538, 0.0
        %v544 = vsel %vm524, %v538, 0.0
        %v545 = vsel %vm525, %v538, 0.0
        %v546 = vsel %vm526, %v538, 0.0
        %v547 = vsel %vm527, %v538, 0.0
        %v548 = vsel %vm528, %v538, 0.0
        %v549 = vsel %vm529, %v538, 0.0
        %v550 = vsel %vm530, %v538, 0.0
        %v551 = vsel %vm531, %v538, 0.0
        %v552 = vsel %vm532, %v538, 0.0
        %v553 = vsel %vm533, %v538, 0.0
        %v554 = vsel %vm534, %v538, 0.0
        %v555 = vsel %vm535, %v538, 0.0
        %v556 = vld [vmem:[#allocation2] sm:$0x3]
        %vm559 = vcmask 1041409
        %v560 = vsel %vm559, %v408, %v402
        %562 = vmatpush.msra.mxu0 %v555
        %563 = vmatpush.msra.mxu0 %v554
        %564 = vmatpush.msra.mxu0 %v553
        %565 = vmatpush.msra.mxu0 %v552
        %566 = vmatpush.msra.mxu0 %v551
        %567 = vmatpush.msra.mxu0 %v550
        %568 = vmatpush.msra.mxu0 %v549
        %569 = vmatpush.msra.mxu0 %v548
        %570 = vmatpush.msra.mxu0 %v547
        %571 = vmatpush.msra.mxu0 %v546
        %572 = vmatpush.msra.mxu0 %v545
        %573 = vmatpush.msra.mxu0 %v544
        %574 = vmatpush.msra.mxu0 %v543
        %575 = vmatpush.msra.mxu0 %v542
        %576 = vmatpush.msra.mxu0 %v541
        %577 = vmatpush.msra.mxu0 %v540
        %578 = vmatmul.f32.gmra.mxu0 %v560
        %v579 = vpop.f32.mrf.mxu0
        %v580 = vadd.f32 0.0, %v579
        %581 = vdwg.mxu0
        %v582 = vadd.f32 %v556, %v580
        %vm583 = vcmask 9216
        %584 = vst.msk [vmem:[#allocation2] sm:$0x3] %vm583, %v582
        %p585 = scmp.eq.s32.totalorder %s16, 1
        // Predicated region
        $region82: #{contrastive_loss.1} parent=72 // pred_check
          %p586 = pneg %p585
        $region83: #{contrastive_loss.1} parent=72 // pred_check_branch
          %588 = sbr.rel (%p586) target = $region85
        $region84: #{contrastive_loss.1} parent=72 // pred_region
          %v589 = vld [vmem:[#allocation2] sm:$0x3]
          %vm590 = vcmp.eq.s32.totalorder %v410, %v427
          %v591 = vsel %vm590, %v589, 0.0
          %v592 = vsel %vm583, %v591, 0.0
          %593 = vadd.xlane.f32.xlu0 %v592
          %v594 = vpop.xlane.xlu0 %593
          %v595 = vrot.slane %v592, 4
          %v596 = vadd.f32 %v592, %v595
          %v597 = vrot.slane %v596, 2
          %v598 = vadd.f32 %v596, %v597
          %v599 = vrot.slane %v598, 1
          %v600 = vadd.f32 %v598, %v599
          %v601 = vadd.f32 %v589, 0.0
          %v602 = vsub.f32 %v601, %v594
          %v603 = vmax.f32 %v602, 0.0
          %v604 = vsel %vm590, 0.0, %v603
          %v605 = vsub.f32 %v601, %v600
          %v606 = vmax.f32 %v605, 0.0
          %v607 = vsel %vm590, 0.0, %v606
          %v608 = vadd.f32 %v604, %v607
          %v609 = vsel %vm583, %v608, 0.0
          %610 = vadd.xlane.f32.xlu0 %v609
          %v611 = vpop.xlane.xlu0 %610
          %vm612 = vcmask 1041408
          %v613 = vsel %vm612, %v611, 0.0
          %v614 = vrot.slane %v613, 4
          %v615 = vadd.f32 %v613, %v614
          %v616 = vrot.slane %v615, 2
          %v617 = vadd.f32 %v615, %v616
          %v618 = vrot.slane %v617, 1
          %v619 = vadd.f32 %v617, %v618
          %v620 = vrcp.pop 4.0
          %v621 = vmul.f32 4.0, %v620
          %v622 = vsub.f32 1.0, %v621
          %v623 = vmul.f32 %v620, %v622
          %v624 = vadd.f32 %v620, %v623
          %vm625 = vweird.f32 %v620
          %v626 = vsel %vm625, %v620, %v624
          %v627 = vmul.f32 %v619, %v626
          %vm628 = vcmask 0
          %629 = vst.msk [vmem:[#allocation4] sm:$0x1] %vm628, %v627
        $region85: #{contrastive_loss.1} parent=72 // pred_fallthru
          _
        // Predicated region
        $region86: #{contrastive_loss.1} parent=72 // pred_check
          %p630 = pneg %p145
        $region87: #{contrastive_loss.1} parent=72 // pred_check_branch
          %632 = sbr.rel (%p630) target = $region89
        $region88: #{contrastive_loss.1} parent=72 // pred_region
          %634 = vsyncadd [#allocation5], 0
          %s636 = sshll.u32 [#allocation4], 4
          %s637 = int_to_ptr.vmem [resolvable:$true] %s636
          %s638 = sshll.u32 %s4, 4
          %s639 = int_to_ptr.hbm [resolvable:$true] %s638
          %641 = dma.vmem_to_hbm [thread:$0]  %s637, 16, %s639, [#allocation5]
        $region89: #{contrastive_loss.1} parent=72 // pred_fallthru
          _
        // Predicated region
        $region90: #{contrastive_loss.1} parent=72 // pred_check
          %p642 = pneg %p145
        $region91: #{contrastive_loss.1} parent=72 // pred_check_branch
          %644 = sbr.rel (%p642) target = $region93
        $region92: #{contrastive_loss.1} parent=72 // pred_region
          %646 = dma.done [#allocation5], 16
        $region93: #{contrastive_loss.1} parent=72 // pred_fallthru
          _
      $region73: #{contrastive_loss.1} parent=5 // pred_fallthru
        _
      %p647 = scmp.le.s32.totalorder 2, %s11
      // Predicated region
      $region94: #{contrastive_loss.1} parent=5 // pred_check
        %p648 = pneg %p647
      $region95: #{contrastive_loss.1} parent=5 // pred_check_branch
        %650 = sbr.rel (%p648) target = $region97
      $region96: #{contrastive_loss.1} parent=5 // pred_region
        %s651 = ssub.s32 %s11, 2
      $region97: #{contrastive_loss.1} parent=5 // pred_fallthru
        _
    $region6: #{contrastive_loss.1} parent=1 // loop_footer
      %s15 = sadd.s32 1, %s11
    $region7: #{contrastive_loss.1} parent=1 // loop_footer_branch
      %10 = sbr.rel target = $region3
    $region8: #{contrastive_loss.1} parent=1 // loop_exit
      _
    %652 = vsyncpa [#allocation5], 1
    %s653 = scalar_lea.sflag [#allocation5], 1
    %654 = vsyncpa %s653, 1

</llo_original>
